<compile_context>
chip_gen: v7x
topology: tpu7x:2x2x1
jax: 0.10.0
libtpu: 0.0.40
codegen_flags: <defaults>
</compile_context>

<pallas_src>
import functools
import math

import jax
import jax.numpy as jnp
from jax.experimental import pallas as pl
from jax.experimental.pallas import tpu as pltpu

K_SMOOTH = 1.0 / 24.0
LANES = 128
SUBLANES = 8


def _multi_circle_sdf_kernel(centers_ref, radii_ref, x_ref, y_ref, o_ref,
                             *, n_circs, k, inv_k):
    # centers_ref: SMEM (n_circs, 2)          -- circle translations t_i
    # radii_ref  : SMEM (n_circs,)            -- circle radii r_i
    # x_ref/y_ref: VMEM (tile_rows, 128)      -- x / y coords of query points
    # o_ref      : VMEM (tile_rows, 128)      -- smooth-union SDF values
    x = x_ref[...]
    y = y_ref[...]

    # Pass 1: per-circle distances + running minimum (no stacking/relayout).
    dists = []
    m = None
    for c in range(n_circs):  # n_circs is small & static -> unrolled
        cx = centers_ref[c, 0]
        cy = centers_ref[c, 1]
        r = radii_ref[c]
        dx = x - cx
        dy = y - cy
        d = jnp.sqrt(dx * dx + dy * dy) - r
        dists.append(d)
        m = d if m is None else jnp.minimum(m, d)

    # Pass 2: numerically stable  -k * log(sum_i exp(-d_i / k))
    #       = m - k * log(sum_i exp((m - d_i) * inv_k))
    s = None
    for d in dists:
        e = jnp.exp((m - d) * inv_k)
        s = e if s is None else s + e

    o_ref[...] = m - k * jnp.log(s)


def multi_circle_sdf(query, centers, radii, *, k=K_SMOOTH, max_tile_rows=1024):
    """query: (N, 2) f32; centers: (C, 2) f32; radii: (C,) f32 -> (N,) f32."""
    n, two = query.shape
    assert two == 2
    n_circs = centers.shape[0]

    # Choose a sublane+lane-dense tiling: rows of 128 points, tile_rows a
    # multiple of 8, grid = rows // tile_rows.  Pad N to fit exactly.
    rows_needed = -(-n // LANES)                                   # ceil(N/128)
    tile_rows = min(((rows_needed + SUBLANES - 1) // SUBLANES) * SUBLANES,
                    max_tile_rows)
    rows = -(-rows_needed // tile_rows) * tile_rows
    n_pad = rows * LANES

    q = query.astype(jnp.float32)
    if n_pad > n:
        q = jnp.pad(q, ((0, n_pad - n), (0, 0)))

    # (n_pad, 2) -> separate lane+sublane-dense x / y planes of shape (rows, 128)
    q_planes = q.reshape(rows, LANES, 2).transpose(2, 0, 1)
    x_plane = q_planes[0]
    y_plane = q_planes[1]

    kernel = functools.partial(
        _multi_circle_sdf_kernel,
        n_circs=n_circs,
        k=float(k),
        inv_k=float(1.0 / k),
    )

    grid = rows // tile_rows

    out = pl.pallas_call(
        kernel,
        out_shape=jax.ShapeDtypeStruct((rows, LANES), jnp.float32),
        grid_spec=pltpu.PrefetchScalarGridSpec(
            num_scalar_prefetch=0,
            grid=(grid,),
            in_specs=[
                pl.BlockSpec(memory_space=pltpu.MemorySpace.SMEM),    # centers
                pl.BlockSpec(memory_space=pltpu.MemorySpace.SMEM),    # radii
                pl.BlockSpec((tile_rows, LANES), lambda i: (i, 0)),   # x tile
                pl.BlockSpec((tile_rows, LANES), lambda i: (i, 0)),   # y tile
            ],
            out_specs=pl.BlockSpec((tile_rows, LANES), lambda i: (i, 0)),
        ),
        compiler_params=pltpu.CompilerParams(
            dimension_semantics=("parallel",),
        ),
    )(centers.astype(jnp.float32), radii.astype(jnp.float32), x_plane, y_plane)

    return out.reshape(n_pad)[:n]


def _reference(query, centers, radii, k=K_SMOOTH):
    # plain-JAX reference identical to the PyTorch forward
    d = jnp.linalg.norm(query[None, :, :] - centers[:, None, :], axis=-1) - radii[:, None]
    m = jnp.min(d, axis=0)
    return m - k * jnp.log(jnp.sum(jnp.exp(-(d - m[None, :]) / k), axis=0))


if __name__ == "__main__":
    key = jax.random.PRNGKey(0)
    k_c, k_r, k_q = jax.random.split(key, 3)

    n_circs = 4
    n_points = 256

    # deterministic parameter init mirroring the module's __init__:
    #   t_i = 0.5 - U(0,1) ,  r_i = 0.1 * U(0,1)
    centers = 0.5 - jax.random.uniform(k_c, (n_circs, 2), dtype=jnp.float32)
    radii = 0.1 * jax.random.uniform(k_r, (n_circs,), dtype=jnp.float32)

    # query points in [-1, 1]^2
    query = jax.random.uniform(
        k_q, (n_points, 2), dtype=jnp.float32, minval=-1.0, maxval=1.0
    )

    out = multi_circle_sdf(query, centers, radii)
    out = jax.block_until_ready(out)

    ref = _reference(query, centers, radii)
    assert out.shape == (n_points,)
    assert jnp.allclose(out, ref, atol=1e-5, rtol=1e-5)

    print("KERNEL_OK")
</pallas_src>

<mosaic_0001>
module attributes {stable_mosaic.version = 11 : i64} {
  func.func @_multi_circle_sdf_kernel(%arg0: i32, %arg1: memref<4x2xf32, #tpu.memory_space<smem>>, %arg2: memref<4xf32, #tpu.memory_space<smem>>, %arg3: memref<8x128xf32, #tpu.memory_space<vmem>>, %arg4: memref<8x128xf32, #tpu.memory_space<vmem>>, %arg5: memref<8x128xf32, #tpu.memory_space<vmem>>) attributes {dimension_semantics = [#tpu.dimension_semantics<parallel>], iteration_bounds = array<i64: 1>, scalar_prefetch = 0 : i64, scratch_operands = 0 : i64, tpu.core_type = #tpu.core_type<tc>, window_params = [{transform_indices = @transform_0, window_bounds = array<i64: 4, 2>}, {transform_indices = @transform_1, window_bounds = array<i64: 4>}, {transform_indices = @transform_2, window_bounds = array<i64: 8, 128>}, {transform_indices = @transform_3, window_bounds = array<i64: 8, 128>}, {transform_indices = @transform_4, window_bounds = array<i64: 8, 128>}]} {
    %c0 = arith.constant 0 : index
    %c0_0 = arith.constant 0 : index
    %0 = vector.load %arg3[%c0, %c0_0] : memref<8x128xf32, #tpu.memory_space<vmem>>, vector<8x128xf32>
    %c0_1 = arith.constant 0 : index
    %c0_2 = arith.constant 0 : index
    %1 = vector.load %arg4[%c0_1, %c0_2] : memref<8x128xf32, #tpu.memory_space<vmem>>, vector<8x128xf32>
    %c0_3 = arith.constant 0 : index
    %c0_4 = arith.constant 0 : index
    %2 = memref.load %arg1[%c0_3, %c0_4] : memref<4x2xf32, #tpu.memory_space<smem>>
    %c0_5 = arith.constant 0 : index
    %c1 = arith.constant 1 : index
    %3 = memref.load %arg1[%c0_5, %c1] : memref<4x2xf32, #tpu.memory_space<smem>>
    %c0_6 = arith.constant 0 : index
    %4 = memref.load %arg2[%c0_6] : memref<4xf32, #tpu.memory_space<smem>>
    %5 = vector.broadcast %2 : f32 to vector<8x128xf32>
    %6 = arith.subf %0, %5 : vector<8x128xf32>
    %7 = vector.broadcast %3 : f32 to vector<8x128xf32>
    %8 = arith.subf %1, %7 : vector<8x128xf32>
    %9 = arith.mulf %6, %6 : vector<8x128xf32>
    %10 = arith.mulf %8, %8 : vector<8x128xf32>
    %11 = arith.addf %9, %10 : vector<8x128xf32>
    %12 = math.sqrt %11 : vector<8x128xf32>
    %13 = vector.broadcast %4 : f32 to vector<8x128xf32>
    %14 = arith.subf %12, %13 : vector<8x128xf32>
    %c1_7 = arith.constant 1 : index
    %c0_8 = arith.constant 0 : index
    %15 = memref.load %arg1[%c1_7, %c0_8] : memref<4x2xf32, #tpu.memory_space<smem>>
    %c1_9 = arith.constant 1 : index
    %c1_10 = arith.constant 1 : index
    %16 = memref.load %arg1[%c1_9, %c1_10] : memref<4x2xf32, #tpu.memory_space<smem>>
    %c1_11 = arith.constant 1 : index
    %17 = memref.load %arg2[%c1_11] : memref<4xf32, #tpu.memory_space<smem>>
    %18 = vector.broadcast %15 : f32 to vector<8x128xf32>
    %19 = arith.subf %0, %18 : vector<8x128xf32>
    %20 = vector.broadcast %16 : f32 to vector<8x128xf32>
    %21 = arith.subf %1, %20 : vector<8x128xf32>
    %22 = arith.mulf %19, %19 : vector<8x128xf32>
    %23 = arith.mulf %21, %21 : vector<8x128xf32>
    %24 = arith.addf %22, %23 : vector<8x128xf32>
    %25 = math.sqrt %24 : vector<8x128xf32>
    %26 = vector.broadcast %17 : f32 to vector<8x128xf32>
    %27 = arith.subf %25, %26 : vector<8x128xf32>
    %28 = arith.minimumf %14, %27 : vector<8x128xf32>
    %c2 = arith.constant 2 : index
    %c0_12 = arith.constant 0 : index
    %29 = memref.load %arg1[%c2, %c0_12] : memref<4x2xf32, #tpu.memory_space<smem>>
    %c2_13 = arith.constant 2 : index
    %c1_14 = arith.constant 1 : index
    %30 = memref.load %arg1[%c2_13, %c1_14] : memref<4x2xf32, #tpu.memory_space<smem>>
    %c2_15 = arith.constant 2 : index
    %31 = memref.load %arg2[%c2_15] : memref<4xf32, #tpu.memory_space<smem>>
    %32 = vector.broadcast %29 : f32 to vector<8x128xf32>
    %33 = arith.subf %0, %32 : vector<8x128xf32>
    %34 = vector.broadcast %30 : f32 to vector<8x128xf32>
    %35 = arith.subf %1, %34 : vector<8x128xf32>
    %36 = arith.mulf %33, %33 : vector<8x128xf32>
    %37 = arith.mulf %35, %35 : vector<8x128xf32>
    %38 = arith.addf %36, %37 : vector<8x128xf32>
    %39 = math.sqrt %38 : vector<8x128xf32>
    %40 = vector.broadcast %31 : f32 to vector<8x128xf32>
    %41 = arith.subf %39, %40 : vector<8x128xf32>
    %42 = arith.minimumf %28, %41 : vector<8x128xf32>
    %c3 = arith.constant 3 : index
    %c0_16 = arith.constant 0 : index
    %43 = memref.load %arg1[%c3, %c0_16] : memref<4x2xf32, #tpu.memory_space<smem>>
    %c3_17 = arith.constant 3 : index
    %c1_18 = arith.constant 1 : index
    %44 = memref.load %arg1[%c3_17, %c1_18] : memref<4x2xf32, #tpu.memory_space<smem>>
    %c3_19 = arith.constant 3 : index
    %45 = memref.load %arg2[%c3_19] : memref<4xf32, #tpu.memory_space<smem>>
    %46 = vector.broadcast %43 : f32 to vector<8x128xf32>
    %47 = arith.subf %0, %46 : vector<8x128xf32>
    %48 = vector.broadcast %44 : f32 to vector<8x128xf32>
    %49 = arith.subf %1, %48 : vector<8x128xf32>
    %50 = arith.mulf %47, %47 : vector<8x128xf32>
    %51 = arith.mulf %49, %49 : vector<8x128xf32>
    %52 = arith.addf %50, %51 : vector<8x128xf32>
    %53 = math.sqrt %52 : vector<8x128xf32>
    %54 = vector.broadcast %45 : f32 to vector<8x128xf32>
    %55 = arith.subf %53, %54 : vector<8x128xf32>
    %56 = arith.minimumf %42, %55 : vector<8x128xf32>
    %57 = arith.subf %56, %14 : vector<8x128xf32>
    %cst = arith.constant 2.400000e+01 : f32
    %58 = vector.broadcast %cst : f32 to vector<8x128xf32>
    %59 = arith.mulf %57, %58 : vector<8x128xf32>
    %60 = math.exp %59 : vector<8x128xf32>
    %61 = arith.subf %56, %27 : vector<8x128xf32>
    %cst_20 = arith.constant 2.400000e+01 : f32
    %62 = vector.broadcast %cst_20 : f32 to vector<8x128xf32>
    %63 = arith.mulf %61, %62 : vector<8x128xf32>
    %64 = math.exp %63 : vector<8x128xf32>
    %65 = arith.addf %60, %64 : vector<8x128xf32>
    %66 = arith.subf %56, %41 : vector<8x128xf32>
    %cst_21 = arith.constant 2.400000e+01 : f32
    %67 = vector.broadcast %cst_21 : f32 to vector<8x128xf32>
    %68 = arith.mulf %66, %67 : vector<8x128xf32>
    %69 = math.exp %68 : vector<8x128xf32>
    %70 = arith.addf %65, %69 : vector<8x128xf32>
    %71 = arith.subf %56, %55 : vector<8x128xf32>
    %cst_22 = arith.constant 2.400000e+01 : f32
    %72 = vector.broadcast %cst_22 : f32 to vector<8x128xf32>
    %73 = arith.mulf %71, %72 : vector<8x128xf32>
    %74 = math.exp %73 : vector<8x128xf32>
    %75 = arith.addf %70, %74 : vector<8x128xf32>
    %76 = math.log %75 : vector<8x128xf32>
    %cst_23 = arith.constant 0.0416666679 : f32
    %77 = vector.broadcast %cst_23 : f32 to vector<8x128xf32>
    %78 = arith.mulf %77, %76 : vector<8x128xf32>
    %79 = arith.subf %56, %78 : vector<8x128xf32>
    %c0_24 = arith.constant 0 : index
    %c0_25 = arith.constant 0 : index
    %80 = vector.load %arg5[%c0_24, %c0_25] : memref<8x128xf32, #tpu.memory_space<vmem>>, vector<8x128xf32>
    tpu.vector_store %arg5[%c0_24, %c0_25], %79 {strides = array<i32>} : memref<8x128xf32, #tpu.memory_space<vmem>>, vector<8x128xf32>,
    return
  }
  func.func @transform_0(%arg0: i32) -> (i32, i32) {
    %c0_i32 = arith.constant 0 : i32
    %c0_i32_0 = arith.constant 0 : i32
    %c0_i32_1 = arith.constant 0 : i32
    return %c0_i32, %c0_i32_0 : i32, i32
  }
  func.func @transform_1(%arg0: i32) -> i32 {
    %c0_i32 = arith.constant 0 : i32
    %c0_i32_0 = arith.constant 0 : i32
    return %c0_i32 : i32
  }
  func.func @transform_2(%arg0: i32) -> (i32, i32) {
    %c0_i32 = arith.constant 0 : i32
    %c0_i32_0 = arith.constant 0 : i32
    return %arg0, %c0_i32 : i32, i32
  }
  func.func @transform_3(%arg0: i32) -> (i32, i32) {
    %c0_i32 = arith.constant 0 : i32
    %c0_i32_0 = arith.constant 0 : i32
    return %arg0, %c0_i32 : i32, i32
  }
  func.func @transform_4(%arg0: i32) -> (i32, i32) {
    %c0_i32 = arith.constant 0 : i32
    %c0_i32_0 = arith.constant 0 : i32
    return %arg0, %c0_i32 : i32, i32
  }
}

</mosaic_0001>

<llo_original>
// kernel: tpu_custom_call.1
$region0: #{tpu_custom_call.1}
  #allocation0 [shape = 'u32[]', space=smem, size = 0x4, offset = 0x4, fixed_abs, tag = 'smem constant byte address 0x4 - core index']
  #allocation1 [shape = 'u32[144,128]{1,0:T(1,128)}', space=vmem, size = 0x12000, scoped, tag = 'internal scratch']
  %s0 = inlined_call_operand.vmem [shape: f32[4,2], index: 0, kind: input, shape index: {}]
  %s1 = inlined_call_operand.vmem [shape: f32[4], index: 1, kind: input, shape index: {}]
  %s2 = inlined_call_operand.vmem [shape: f32[8,128], index: 2, kind: input, shape index: {}]
  %s3 = inlined_call_operand.vmem [shape: f32[8,128], index: 3, kind: input, shape index: {}]
  %s4 = inlined_call_operand.hbm [shape: f32[8,128], index: 4, kind: output, shape index: {}]
  %s5 = sld [smem:[#allocation0]]
  $region34: #{tpu_custom_call.1} parent=0
    _
  %s7 = ssub.s32 1, %s5
  %s8 = scalar_select 0, %s7, %s5
  $region1: #{tpu_custom_call.1} parent=0
    #allocation2 [shape = 'u8[2048]{0}', space=smem, size = 0x800, scoped, tag = 'input window, operand 0, single buffered']
    #allocation3 [shape = 's32[1]{0}', space=sflag, size = 0x4, scoped, tag = 'scoped memory for tpu_custom_call.1']
    #allocation4 [shape = 's32[1]{0}', space=sflag, size = 0x4, scoped, tag = 'scoped memory for tpu_custom_call.1']
    #allocation5 [shape = 'u8[512]{0}', space=smem, size = 0x200, scoped, tag = 'input window, operand 1, single buffered']
    #allocation6 [shape = 's32[1]{0}', space=sflag, size = 0x4, scoped, tag = 'scoped memory for tpu_custom_call.1']
    #allocation7 [shape = 'u8[4096]{0}', space=vmem, size = 0x1000, scoped, tag = 'output window, operand 0, single buffered']
    %9 = vsyncpa [#allocation4], 0
    %10 = vsyncpa [#allocation6], 0
    %11 = vsyncpa [#allocation3], 0
    // Predicated region
    $region2: #{tpu_custom_call.1} parent=1 // pred_check
      _
    $region3: #{tpu_custom_call.1} parent=1 // pred_check_branch
      %13 = sbr.rel (0) target = $region5
    $region4: #{tpu_custom_call.1} parent=1 // pred_region
      %s15 = ssub.s32 64, 64
      %16 = vsyncadd [#allocation4], %s15
      %s18 = sshll.u32 %s0, 4
      %s19 = int_to_ptr.vmem [resolvable:$true] %s18
      %21 = dma.vmem_to_smem %s19, 64, [#allocation2], [#allocation4]
    $region5: #{tpu_custom_call.1} parent=1 // pred_fallthru
      _
    // Predicated region
    $region6: #{tpu_custom_call.1} parent=1 // pred_check
      _
    $region7: #{tpu_custom_call.1} parent=1 // pred_check_branch
      %23 = sbr.rel (0) target = $region9
    $region8: #{tpu_custom_call.1} parent=1 // pred_region
      %s25 = ssub.s32 16, 16
      %26 = vsyncadd [#allocation6], %s25
      %s28 = sshll.u32 %s1, 4
      %s29 = int_to_ptr.vmem [resolvable:$true] %s28
      %31 = dma.vmem_to_smem %s29, 16, [#allocation5], [#allocation6]
    $region9: #{tpu_custom_call.1} parent=1 // pred_fallthru
      _
    // Predicated region
    $region10: #{tpu_custom_call.1} parent=1 // pred_check
      _
    $region11: #{tpu_custom_call.1} parent=1 // pred_check_branch
      %33 = sbr.rel (0) target = $region13
    $region12: #{tpu_custom_call.1} parent=1 // pred_region
      _
    $region13: #{tpu_custom_call.1} parent=1 // pred_fallthru
      _
    // Predicated region
    $region14: #{tpu_custom_call.1} parent=1 // pred_check
      _
    $region15: #{tpu_custom_call.1} parent=1 // pred_check_branch
      %35 = sbr.rel (0) target = $region17
    $region16: #{tpu_custom_call.1} parent=1 // pred_region
      _
    $region17: #{tpu_custom_call.1} parent=1 // pred_fallthru
      _
    // Predicated region
    $region18: #{tpu_custom_call.1} parent=1 // pred_check
      _
    $region19: #{tpu_custom_call.1} parent=1 // pred_check_branch
      %37 = sbr.rel (0) target = $region21
    $region20: #{tpu_custom_call.1} parent=1 // pred_region
      %38 = dma.done [#allocation4], 64
    $region21: #{tpu_custom_call.1} parent=1 // pred_fallthru
      _
    // Predicated region
    $region22: #{tpu_custom_call.1} parent=1 // pred_check
      _
    $region23: #{tpu_custom_call.1} parent=1 // pred_check_branch
      %40 = sbr.rel (0) target = $region25
    $region24: #{tpu_custom_call.1} parent=1 // pred_region
      %41 = dma.done [#allocation6], 16
    $region25: #{tpu_custom_call.1} parent=1 // pred_fallthru
      _
    %42 = sfence
    %v43 = vld [vmem:[%s2] sm:$0xff]
    %v44 = vld [vmem:[%s3] sm:$0xff]
    %s45 = sld [smem:[#allocation2]]
    %s46 = sld [smem:[#allocation2 + $0x1]]
    %s47 = sld [smem:[#allocation5]]
    %v48 = vstv %s45
    %v49 = vsub.f32 %v43, %v48
    %v50 = vstv %s46
    %v51 = vsub.f32 %v44, %v50
    %v52 = vmul.f32 %v49, %v49
    %v53 = vmul.f32 %v51, %v51
    %v54 = vadd.f32 %v52, %v53
    %v55 = vrsqrt.pop %v54
    %v56 = vmul.f32 %v54, %v55
    %vm57 = vcmp.eq.f32.partialorder %v54, inf
    %v58 = vsel %vm57, %v54, %v56
    %vm59 = vcmp.eq.f32.partialorder %v54, 0.0
    %v60 = vand.u32 %v54, 2147483648
    %v61 = vsel %vm59, %v60, %v58
    %v62 = vstv %s47
    %v63 = vsub.f32 %v61, %v62
    %s64 = sld [smem:[#allocation2 + $0x80]]
    %s65 = sld [smem:[#allocation2 + $0x81]]
    %s66 = sld [smem:[#allocation5 + $0x1]]
    %v67 = vstv %s64
    %v68 = vsub.f32 %v43, %v67
    %v69 = vstv %s65
    %v70 = vsub.f32 %v44, %v69
    %v71 = vmul.f32 %v68, %v68
    %v72 = vmul.f32 %v70, %v70
    %v73 = vadd.f32 %v71, %v72
    %v74 = vrsqrt.pop %v73
    %v75 = vmul.f32 %v73, %v74
    %vm76 = vcmp.eq.f32.partialorder %v73, inf
    %v77 = vsel %vm76, %v73, %v75
    %vm78 = vcmp.eq.f32.partialorder %v73, 0.0
    %v79 = vand.u32 %v73, 2147483648
    %v80 = vsel %vm78, %v79, %v77
    %v81 = vstv %s66
    %v82 = vsub.f32 %v80, %v81
    %v83 = vmin.f32 %v63, %v82
    %s84 = sld [smem:[#allocation2 + $0x100]]
    %s85 = sld [smem:[#allocation2 + $0x101]]
    %s86 = sld [smem:[#allocation5 + $0x2]]
    %v87 = vstv %s84
    %v88 = vsub.f32 %v43, %v87
    %v89 = vstv %s85
    %v90 = vsub.f32 %v44, %v89
    %v91 = vmul.f32 %v88, %v88
    %v92 = vmul.f32 %v90, %v90
    %v93 = vadd.f32 %v91, %v92
    %v94 = vrsqrt.pop %v93
    %v95 = vmul.f32 %v93, %v94
    %vm96 = vcmp.eq.f32.partialorder %v93, inf
    %v97 = vsel %vm96, %v93, %v95
    %vm98 = vcmp.eq.f32.partialorder %v93, 0.0
    %v99 = vand.u32 %v93, 2147483648
    %v100 = vsel %vm98, %v99, %v97
    %v101 = vstv %s86
    %v102 = vsub.f32 %v100, %v101
    %v103 = vmin.f32 %v83, %v102
    %s104 = sld [smem:[#allocation2 + $0x180]]
    %s105 = sld [smem:[#allocation2 + $0x181]]
    %s106 = sld [smem:[#allocation5 + $0x3]]
    %v107 = vstv %s104
    %v108 = vsub.f32 %v43, %v107
    %v109 = vstv %s105
    %v110 = vsub.f32 %v44, %v109
    %v111 = vmul.f32 %v108, %v108
    %v112 = vmul.f32 %v110, %v110
    %v113 = vadd.f32 %v111, %v112
    %v114 = vrsqrt.pop %v113
    %v115 = vmul.f32 %v113, %v114
    %vm116 = vcmp.eq.f32.partialorder %v113, inf
    %v117 = vsel %vm116, %v113, %v115
    %vm118 = vcmp.eq.f32.partialorder %v113, 0.0
    %v119 = vand.u32 %v113, 2147483648
    %v120 = vsel %vm118, %v119, %v117
    %v121 = vstv %s106
    %v122 = vsub.f32 %v120, %v121
    %v123 = vmin.f32 %v103, %v122
    %v124 = vsub.f32 %v123, %v63
    %v125 = vmul.f32 %v124, 24.0
    %v126 = vmul.f32 %v125, 1.442695
    %v127 = vpow.pop %v126
    %v128 = vsub.f32 %v123, %v82
    %v129 = vmul.f32 %v128, 24.0
    %v130 = vmul.f32 %v129, 1.442695
    %v131 = vpow.pop %v130
    %v132 = vadd.f32 %v127, %v131
    %v133 = vsub.f32 %v123, %v102
    %v134 = vmul.f32 %v133, 24.0
    %v135 = vmul.f32 %v134, 1.442695
    %v136 = vpow.pop %v135
    %v137 = vadd.f32 %v132, %v136
    %v138 = vsub.f32 %v123, %v122
    %v139 = vmul.f32 %v138, 24.0
    %v140 = vmul.f32 %v139, 1.442695
    %v141 = vpow.pop %v140
    %v142 = vadd.f32 %v137, %v141
    %v143 = vlog2.pop %v142
    %v144 = vmul.f32 %v143, 0.6931472
    %v145 = vmul.f32 %v144, 0.041666668
    %v146 = vsub.f32 %v123, %v145
    %147 = vst [vmem:[#allocation7] sm:$0xff] %v146
    // Predicated region
    $region26: #{tpu_custom_call.1} parent=1 // pred_check
      _
    $region27: #{tpu_custom_call.1} parent=1 // pred_check_branch
      %149 = sbr.rel (0) target = $region29
    $region28: #{tpu_custom_call.1} parent=1 // pred_region
      %s151 = ssub.s32 128, 128
      %152 = vsyncadd [#allocation3], %s151
      %s154 = sshll.u32 [#allocation7], 4
      %s155 = int_to_ptr.vmem [resolvable:$true] %s154
      %157 = dma.vmem_to_hbm [thread:$0]  %s155, 128, %s4, [#allocation3]
    $region29: #{tpu_custom_call.1} parent=1 // pred_fallthru
      _
    // Predicated region
    $region30: #{tpu_custom_call.1} parent=1 // pred_check
      _
    $region31: #{tpu_custom_call.1} parent=1 // pred_check_branch
      %159 = sbr.rel (0) target = $region33
    $region32: #{tpu_custom_call.1} parent=1 // pred_region
      %160 = dma.done [#allocation3], 128
    $region33: #{tpu_custom_call.1} parent=1 // pred_fallthru
      _
    %161 = vsyncpa [#allocation3], 1
    %162 = vsyncpa [#allocation4], 1
    %163 = vsyncpa [#allocation6], 1

</llo_original>
